<compile_context>
chip_gen: v6e
topology: v6e:2x2x1
jax: 0.10.0
libtpu: 0.0.40
codegen_flags: <defaults>
</compile_context>

<pallas_src>
import functools

import jax
import jax.numpy as jnp
from jax import lax
from jax.experimental import pallas as pl
from jax.experimental.pallas import tpu as pltpu

EPS = 1e-5


def _round_up(x, m):
    return (x + m - 1) // m * m


# --------------------------------------------------------------------------
# Fused Pallas kernels: matmul (bf16 x bf16 -> f32) + BatchNorm (+ReLU/+add)
# --------------------------------------------------------------------------

def _matmul_bn_kernel(a_ref, w_ref, o_ref, *, relu):
    acc = jnp.dot(a_ref[...], w_ref[...], preferred_element_type=jnp.float32)
    mean = jnp.mean(acc, axis=0, keepdims=True)
    var = jnp.mean(jnp.square(acc - mean), axis=0, keepdims=True)
    y = (acc - mean) * lax.rsqrt(var + EPS)
    if relu:
        y = jnp.maximum(y, 0.0)
    o_ref[...] = y.astype(o_ref.dtype)


def _matmul_bn_add_relu_kernel(a_ref, w_ref, r_ref, o_ref):
    acc = jnp.dot(a_ref[...], w_ref[...], preferred_element_type=jnp.float32)
    mean = jnp.mean(acc, axis=0, keepdims=True)
    var = jnp.mean(jnp.square(acc - mean), axis=0, keepdims=True)
    y = (acc - mean) * lax.rsqrt(var + EPS)
    y = y + r_ref[...].astype(jnp.float32)
    o_ref[...] = jnp.maximum(y, 0.0).astype(o_ref.dtype)


@functools.partial(jax.jit, static_argnames=("kh", "kw", "stride", "padding", "mode"))
def conv_bn(x, w, residual=None, *, kh, kw, stride, padding, mode):
    """Fused conv (bias-free) + BatchNorm (+ReLU / +residual-add+ReLU).

    x        : NHWC bf16 activation (channel dim already padded to 128-multiple,
               except the raw 3-channel network input).
    w        : pre-packed (Kp, Np) bf16 weight matrix (im2col layout, zero-padded).
    residual : NHWC bf16 with Np channels (only for mode == 'add_relu').
    mode     : 'relu' | 'plain' | 'add_relu'.
    Returns NHWC bf16 with Np channels.
    """
    N, H, W, C = x.shape
    Kp, Np = w.shape

    # im2col (plain-JAX glue).
    if kh == 1 and kw == 1:
        xs = x[:, ::stride, ::stride, :]
        Ho, Wo = xs.shape[1], xs.shape[2]
        a = xs.reshape(N * Ho * Wo, C)
    else:
        xp = jnp.pad(x, ((0, 0), (padding, padding), (padding, padding), (0, 0)))
        Ho = (H + 2 * padding - kh) // stride + 1
        Wo = (W + 2 * padding - kw) // stride + 1
        cols = [xp[:, i:i + stride * Ho:stride, j:j + stride * Wo:stride, :]
                for i in range(kh) for j in range(kw)]
        a = jnp.concatenate(cols, axis=-1).reshape(N * Ho * Wo, kh * kw * C)
    if a.shape[1] < Kp:                      # only conv1 (K=27 -> 128) hits this
        a = jnp.pad(a, ((0, 0), (0, Kp - a.shape[1])))
    a = a.astype(jnp.bfloat16)

    M = a.shape[0]
    tn = 256 if Np % 256 == 0 else 128       # wide lane-dense tiles where possible
    grid = (Np // tn,)

    in_specs = [pl.BlockSpec((M, Kp), lambda j: (0, 0)),
                pl.BlockSpec((Kp, tn), lambda j: (0, j))]
    args = [a, w]
    if mode == "add_relu":
        r = residual.reshape(M, Np).astype(jnp.bfloat16)
        in_specs.append(pl.BlockSpec((M, tn), lambda j: (0, j)))
        args.append(r)
        kernel = _matmul_bn_add_relu_kernel
    else:
        kernel = functools.partial(_matmul_bn_kernel, relu=(mode == "relu"))

    out = pl.pallas_call(
        kernel,
        out_shape=jax.ShapeDtypeStruct((M, Np), jnp.bfloat16),
        grid=grid,
        in_specs=in_specs,
        out_specs=pl.BlockSpec((M, tn), lambda j: (0, j)),
        compiler_params=pltpu.CompilerParams(
            dimension_semantics=("parallel",),
            vmem_limit_bytes=32 * 1024 * 1024),
    )(*args)
    return out.reshape(N, Ho, Wo, Np)


# --------------------------------------------------------------------------
# Fused head: AvgPool2d(2) on the 2x2 map + fc1(+relu) + fc2(+relu) + fc3
# --------------------------------------------------------------------------

def _head_kernel(x_ref, w1_ref, b1_ref, w2_ref, b2_ref, w3_ref, b3_ref, o_ref):
    x = jnp.mean(x_ref[...].astype(jnp.float32), axis=1)          # (N, 2048)
    h = jnp.dot(x.astype(jnp.bfloat16), w1_ref[...],
                preferred_element_type=jnp.float32) + b1_ref[...]
    h = jnp.maximum(h, 0.0)
    h = jnp.dot(h.astype(jnp.bfloat16), w2_ref[...],
                preferred_element_type=jnp.float32) + b2_ref[...]
    h = jnp.maximum(h, 0.0)
    o_ref[...] = jnp.dot(h.astype(jnp.bfloat16), w3_ref[...],
                         preferred_element_type=jnp.float32) + b3_ref[...]


@jax.jit
def head(x, w1, b1, w2, b2, w3, b3):
    N, H, W, C = x.shape
    xf = x.reshape(N, H * W, C)
    n_out = w3.shape[1]
    return pl.pallas_call(
        _head_kernel,
        out_shape=jax.ShapeDtypeStruct((N, n_out), jnp.float32),
        grid=(1,),
        in_specs=[
            pl.BlockSpec((N, H * W, C), lambda i: (0, 0, 0)),
            pl.BlockSpec(w1.shape, lambda i: (0, 0)),
            pl.BlockSpec((1, b1.shape[0]), lambda i: (0, 0)),
            pl.BlockSpec(w2.shape, lambda i: (0, 0)),
            pl.BlockSpec((1, b2.shape[0]), lambda i: (0, 0)),
            pl.BlockSpec(w3.shape, lambda i: (0, 0)),
            pl.BlockSpec((1, b3.shape[0]), lambda i: (0, 0)),
        ],
        out_specs=pl.BlockSpec((N, n_out), lambda i: (0, 0)),
        compiler_params=pltpu.CompilerParams(vmem_limit_bytes=32 * 1024 * 1024),
    )(xf, w1, b1.reshape(1, -1), w2, b2.reshape(1, -1), w3, b3.reshape(1, -1))


# --------------------------------------------------------------------------
# Parameters: deterministic synthetic weights, pre-packed for the fused matmul
# --------------------------------------------------------------------------

def make_params(key):
    keys = jax.random.split(key, 512)
    it = iter(keys)

    def nk():
        return next(it)

    def conv_w(cout, cin, k, in_ch):
        """PyTorch-layout draw (cout,cin,k,k), packed to (Kp, Np) bf16.

        in_ch = channel count of the incoming activation (padded to 128-mult,
        except the raw 3-channel image for conv1); each of the k*k taps is
        zero-padded from cin to in_ch so it matches the im2col column layout.
        """
        fan_in = cin * k * k
        w = jax.random.normal(nk(), (cout, cin, k, k), jnp.float32) * (2.0 / fan_in) ** 0.5
        wt = jnp.transpose(w, (2, 3, 1, 0))                       # (k,k,cin,cout)
        wt = jnp.pad(wt, ((0, 0), (0, 0), (0, in_ch - cin), (0, 0)))
        K = k * k * in_ch
        Kp = _round_up(K, 128)
        Np = _round_up(cout, 128)
        wm = wt.reshape(K, cout)
        wm = jnp.pad(wm, ((0, Kp - K), (0, Np - cout)))
        return wm.astype(jnp.bfloat16)

    p = {}
    p['conv1'] = conv_w(64, 3, 3, 3)
    p['conv2a1'] = conv_w(64, 64, 1, 128)
    p['conv2a2'] = conv_w(64, 64, 3, 128)
    p['conv2a3'] = conv_w(256, 64, 1, 128)
    p['conv2a4'] = conv_w(256, 64, 1, 128)
    p['conv3a1'] = conv_w(128, 256, 1, 256)
    p['conv3a2'] = conv_w(128, 128, 3, 128)
    p['conv3a3'] = conv_w(512, 128, 1, 128)
    p['conv3a4'] = conv_w(512, 256, 1, 256)
    p['conv4a1'] = conv_w(256, 512, 1, 512)
    p['conv4a2'] = conv_w(256, 256, 3, 256)
    p['conv4a3'] = conv_w(1024, 256, 1, 256)
    p['conv4a4'] = conv_w(1024, 512, 1, 512)
    p['conv5a1'] = conv_w(512, 1024, 1, 1024)
    p['conv5a2'] = conv_w(512, 512, 3, 512)
    p['conv5a3'] = conv_w(2048, 512, 1, 512)
    p['conv5a4'] = conv_w(2048, 1024, 1, 1024)
    p['conv2b1'] = [conv_w(64, 256, 1, 256) for _ in range(2)]
    p['conv2b2'] = [conv_w(64, 64, 3, 128) for _ in range(2)]
    p['conv2b3'] = [conv_w(256, 64, 1, 128) for _ in range(2)]
    p['conv3b1'] = [conv_w(128, 512, 1, 512) for _ in range(7)]
    p['conv3b2'] = [conv_w(128, 128, 3, 128) for _ in range(7)]
    p['conv3b3'] = [conv_w(512, 128, 1, 128) for _ in range(7)]
    p['conv4b1'] = [conv_w(256, 1024, 1, 1024) for _ in range(35)]
    p['conv4b2'] = [conv_w(256, 256, 3, 256) for _ in range(35)]
    p['conv4b3'] = [conv_w(1024, 256, 1, 256) for _ in range(35)]
    p['conv5b1'] = [conv_w(512, 2048, 1, 2048) for _ in range(2)]
    p['conv5b2'] = [conv_w(512, 512, 3, 512) for _ in range(2)]
    p['conv5b3'] = [conv_w(2048, 512, 1, 512) for _ in range(2)]

    def lin(cin, cout):
        w = jax.random.normal(nk(), (cin, cout), jnp.float32) * (1.0 / cin) ** 0.5
        return w.astype(jnp.bfloat16), jnp.zeros((cout,), jnp.float32)

    p['fc1_w'], p['fc1_b'] = lin(2048, 512)
    p['fc2_w'], p['fc2_b'] = lin(512, 64)
    p['fc3_w'], p['fc3_b'] = lin(64, 10)
    return p


# --------------------------------------------------------------------------
# Forward pass (mirrors Net.forward)
# --------------------------------------------------------------------------

def forward(p, x_nchw):
    x = jnp.transpose(x_nchw, (0, 2, 3, 1)).astype(jnp.bfloat16)   # NCHW -> NHWC

    x = conv_bn(x, p['conv1'], kh=3, kw=3, stride=2, padding=1, mode='relu')

    # stage 2
    out = conv_bn(x, p['conv2a1'], kh=1, kw=1, stride=1, padding=0, mode='relu')
    out = conv_bn(out, p['conv2a2'], kh=3, kw=3, stride=1, padding=1, mode='relu')
    out = conv_bn(out, p['conv2a3'], kh=1, kw=1, stride=1, padding=0, mode='plain')
    x = conv_bn(x, p['conv2a4'], out, kh=1, kw=1, stride=1, padding=0, mode='add_relu')
    for i in range(2):
        out = conv_bn(x, p['conv2b1'][i], kh=1, kw=1, stride=1, padding=0, mode='relu')
        out = conv_bn(out, p['conv2b2'][i], kh=3, kw=3, stride=1, padding=1, mode='relu')
        x = conv_bn(out, p['conv2b3'][i], x, kh=1, kw=1, stride=1, padding=0, mode='add_relu')

    # stage 3
    out = conv_bn(x, p['conv3a1'], kh=1, kw=1, stride=2, padding=0, mode='relu')
    out = conv_bn(out, p['conv3a2'], kh=3, kw=3, stride=1, padding=1, mode='relu')
    out = conv_bn(out, p['conv3a3'], kh=1, kw=1, stride=1, padding=0, mode='plain')
    x = conv_bn(x, p['conv3a4'], out, kh=1, kw=1, stride=2, padding=0, mode='add_relu')
    for i in range(7):
        out = conv_bn(x, p['conv3b1'][i], kh=1, kw=1, stride=1, padding=0, mode='relu')
        out = conv_bn(out, p['conv3b2'][i], kh=3, kw=3, stride=1, padding=1, mode='relu')
        x = conv_bn(out, p['conv3b3'][i], x, kh=1, kw=1, stride=1, padding=0, mode='add_relu')

    # stage 4
    out = conv_bn(x, p['conv4a1'], kh=1, kw=1, stride=2, padding=0, mode='relu')
    out = conv_bn(out, p['conv4a2'], kh=3, kw=3, stride=1, padding=1, mode='relu')
    out = conv_bn(out, p['conv4a3'], kh=1, kw=1, stride=1, padding=0, mode='plain')
    x = conv_bn(x, p['conv4a4'], out, kh=1, kw=1, stride=2, padding=0, mode='add_relu')
    for i in range(35):
        out = conv_bn(x, p['conv4b1'][i], kh=1, kw=1, stride=1, padding=0, mode='relu')
        out = conv_bn(out, p['conv4b2'][i], kh=3, kw=3, stride=1, padding=1, mode='relu')
        x = conv_bn(out, p['conv4b3'][i], x, kh=1, kw=1, stride=1, padding=0, mode='add_relu')

    # stage 5
    out = conv_bn(x, p['conv5a1'], kh=1, kw=1, stride=2, padding=0, mode='relu')
    out = conv_bn(out, p['conv5a2'], kh=3, kw=3, stride=1, padding=1, mode='relu')
    out = conv_bn(out, p['conv5a3'], kh=1, kw=1, stride=1, padding=0, mode='plain')
    x = conv_bn(x, p['conv5a4'], out, kh=1, kw=1, stride=2, padding=0, mode='add_relu')
    for i in range(2):
        out = conv_bn(x, p['conv5b1'][i], kh=1, kw=1, stride=1, padding=0, mode='relu')
        out = conv_bn(out, p['conv5b2'][i], kh=3, kw=3, stride=1, padding=1, mode='relu')
        x = conv_bn(out, p['conv5b3'][i], x, kh=1, kw=1, stride=1, padding=0, mode='add_relu')

    # avgpool(2) on the 2x2 map + view(-1, 2048) + fc1/fc2/fc3 in one kernel
    return head(x, p['fc1_w'], p['fc1_b'], p['fc2_w'], p['fc2_b'],
                p['fc3_w'], p['fc3_b'])


if __name__ == "__main__":
    key = jax.random.PRNGKey(0)
    pkey, xkey = jax.random.split(key)
    params = make_params(pkey)
    # 32x32 spatial is the smallest input consistent with x.view(-1, 2048)
    # (total spatial downsample factor of the net is 32).
    x = jax.random.normal(xkey, (2, 3, 32, 32), jnp.float32)
    y = forward(params, x)
    y = jax.block_until_ready(y)
    assert y.shape == (2, 10), y.shape
    assert bool(jnp.all(jnp.isfinite(y)))
    print("KERNEL_OK")
</pallas_src>

<mosaic_0001>
module attributes {stable_mosaic.version = 11 : i64} {
  func.func @_matmul_bn_kernel(%arg0: i32, %arg1: memref<512x128xbf16, #tpu.memory_space<vmem>>, %arg2: memref<128x128xbf16, #tpu.memory_space<vmem>>, %arg3: memref<512x128xbf16, #tpu.memory_space<vmem>>) attributes {dimension_semantics = [#tpu.dimension_semantics<parallel>], iteration_bounds = array<i64: 1>, scalar_prefetch = 0 : i64, scratch_operands = 0 : i64, tpu.core_type = #tpu.core_type<tc>, window_params = [{pipeline_mode = #tpu.pipeline_mode<synchronous>, transform_indices = @transform_0, window_bounds = array<i64: 512, 128>}, {transform_indices = @transform_1, window_bounds = array<i64: 128, 128>}, {transform_indices = @transform_2, window_bounds = array<i64: 512, 128>}]} {
    %c0 = arith.constant 0 : index
    %c0_0 = arith.constant 0 : index
    %0 = vector.load %arg1[%c0, %c0_0] : memref<512x128xbf16, #tpu.memory_space<vmem>>, vector<512x128xbf16>
    %c0_1 = arith.constant 0 : index
    %c0_2 = arith.constant 0 : index
    %1 = vector.load %arg2[%c0_1, %c0_2] : memref<128x128xbf16, #tpu.memory_space<vmem>>, vector<128x128xbf16>
    %cst = arith.constant dense<0.000000e+00> : vector<512x128xf32>
    %2 = tpu.matmul %0, %1, %cst {dimension_numbers = #tpu.dot_dimension_numbers<[1], [0], [0], [1], [0, 0, 1, 1], [], []>} : vector<512x128xbf16>, vector<128x128xbf16>, vector<512x128xf32> -> vector<512x128xf32>
    %cst_3 = arith.constant dense<0.000000e+00> : vector<128xf32>
    %3 = vector.multi_reduction <add>, %2, %cst_3 [0] : vector<512x128xf32> to vector<128xf32>
    %4 = vector.shape_cast %3 : vector<128xf32> to vector<1x128xf32>
    %cst_4 = arith.constant 5.120000e+02 : f32
    %5 = vector.broadcast %cst_4 : f32 to vector<1x128xf32>
    %6 = arith.divf %4, %5 : vector<1x128xf32>
    %7 = vector.broadcast %6 : vector<1x128xf32> to vector<512x128xf32>
    %8 = arith.subf %2, %7 : vector<512x128xf32>
    %9 = arith.mulf %8, %8 : vector<512x128xf32>
    %cst_5 = arith.constant dense<0.000000e+00> : vector<128xf32>
    %10 = vector.multi_reduction <add>, %9, %cst_5 [0] : vector<512x128xf32> to vector<128xf32>
    %11 = vector.shape_cast %10 : vector<128xf32> to vector<1x128xf32>
    %cst_6 = arith.constant 5.120000e+02 : f32
    %12 = vector.broadcast %cst_6 : f32 to vector<1x128xf32>
    %13 = arith.divf %11, %12 : vector<1x128xf32>
    %14 = vector.broadcast %6 : vector<1x128xf32> to vector<512x128xf32>
    %15 = arith.subf %2, %14 : vector<512x128xf32>
    %cst_7 = arith.constant 9.99999974E-6 : f32
    %16 = vector.broadcast %cst_7 : f32 to vector<1x128xf32>
    %17 = arith.addf %13, %16 : vector<1x128xf32>
    %18 = math.rsqrt %17 : vector<1x128xf32>
    %19 = vector.broadcast %18 : vector<1x128xf32> to vector<512x128xf32>
    %20 = arith.mulf %15, %19 : vector<512x128xf32>
    %cst_8 = arith.constant 0.000000e+00 : f32
    %21 = vector.broadcast %cst_8 : f32 to vector<512x128xf32>
    %22 = arith.maximumf %20, %21 : vector<512x128xf32>
    %23 = arith.truncf %22 : vector<512x128xf32> to vector<512x128xbf16>
    %c0_9 = arith.constant 0 : index
    %c0_10 = arith.constant 0 : index
    %24 = vector.load %arg3[%c0_9, %c0_10] : memref<512x128xbf16, #tpu.memory_space<vmem>>, vector<512x128xbf16>
    tpu.vector_store %arg3[%c0_9, %c0_10], %23 {strides = array<i32>} : memref<512x128xbf16, #tpu.memory_space<vmem>>, vector<512x128xbf16>,
    return
  }
  func.func @transform_0(%arg0: i32) -> (i32, i32) {
    %c0_i32 = arith.constant 0 : i32
    %c0_i32_0 = arith.constant 0 : i32
    %c0_i32_1 = arith.constant 0 : i32
    return %c0_i32, %c0_i32_0 : i32, i32
  }
  func.func @transform_1(%arg0: i32) -> (i32, i32) {
    %c0_i32 = arith.constant 0 : i32
    %c0_i32_0 = arith.constant 0 : i32
    return %c0_i32, %arg0 : i32, i32
  }
  func.func @transform_2(%arg0: i32) -> (i32, i32) {
    %c0_i32 = arith.constant 0 : i32
    %c0_i32_0 = arith.constant 0 : i32
    return %c0_i32, %arg0 : i32, i32
  }
}

</mosaic_0001>

<llo_original>
// kernel: conv_bn.1
$region0: #{conv_bn.1}
  #allocation0 [shape = 'u32[]', space=smem, size = 0x4, offset = 0x4, fixed_abs, tag = 'smem constant byte address 0x4 - core index']
  #allocation1 [shape = 'u32[144,128]{1,0:T(1,128)}', space=vmem, size = 0x12000, scoped, tag = 'internal scratch']
  %s0 = inlined_call_operand.vmem [shape: bf16[512,128], index: 0, kind: input, shape index: {}]
  %s1 = inlined_call_operand.vmem [shape: bf16[128,128], index: 1, kind: input, shape index: {}]
  %s2 = inlined_call_operand.hbm [shape: bf16[512,128], index: 2, kind: output, shape index: {}]
  %s3 = sld [smem:[#allocation0]]
  $region18: #{conv_bn.1} parent=0
    _
  %s5 = ssub.s32 1, %s3
  %s6 = scalar_select 0, %s5, %s3
  $region1: #{conv_bn.1} parent=0
    #allocation2 [shape = 'u8[131072]{0}', space=vmem, size = 0x20000, scoped, tag = 'output window, operand 0, single buffered']
    #allocation3 [shape = 's32[1]{0}', space=sflag, size = 0x4, scoped, tag = 'scoped memory for conv_bn.1']
    %7 = vsyncpa [#allocation3], 0
    // Predicated region
    $region2: #{conv_bn.1} parent=1 // pred_check
      _
    $region3: #{conv_bn.1} parent=1 // pred_check_branch
      %9 = sbr.rel (0) target = $region5
    $region4: #{conv_bn.1} parent=1 // pred_region
      _
    $region5: #{conv_bn.1} parent=1 // pred_fallthru
      _
    // Predicated region
    $region6: #{conv_bn.1} parent=1 // pred_check
      _
    $region7: #{conv_bn.1} parent=1 // pred_check_branch
      %11 = sbr.rel (0) target = $region9
    $region8: #{conv_bn.1} parent=1 // pred_region
      _
    $region9: #{conv_bn.1} parent=1 // pred_fallthru
      _
    %v13 = vld [vmem:[%s0] sm:$0xf]
    %v14 = vld [vmem:[%s0 + $0x4] sm:$0xf]
    %v15 = vld [vmem:[%s0 + $0x8] sm:$0xf]
    %v16 = vld [vmem:[%s0 + $0xc] sm:$0xf]
    %v17 = vld [vmem:[%s0 + $0x10] sm:$0xf]
    %v18 = vld [vmem:[%s0 + $0x14] sm:$0xf]
    %v19 = vld [vmem:[%s0 + $0x18] sm:$0xf]
    %v20 = vld [vmem:[%s0 + $0x1c] sm:$0xf]
    %v21 = vld [vmem:[%s0 + $0x20] sm:$0xf]
    %v22 = vld [vmem:[%s0 + $0x24] sm:$0xf]
    %v23 = vld [vmem:[%s0 + $0x28] sm:$0xf]
    %v24 = vld [vmem:[%s0 + $0x2c] sm:$0xf]
    %v25 = vld [vmem:[%s0 + $0x30] sm:$0xf]
    %v26 = vld [vmem:[%s0 + $0x34] sm:$0xf]
    %v27 = vld [vmem:[%s0 + $0x38] sm:$0xf]
    %v28 = vld [vmem:[%s0 + $0x3c] sm:$0xf]
    %v29 = vld [vmem:[%s0 + $0x40] sm:$0xf]
    %v30 = vld [vmem:[%s0 + $0x44] sm:$0xf]
    %v31 = vld [vmem:[%s0 + $0x48] sm:$0xf]
    %v32 = vld [vmem:[%s0 + $0x4c] sm:$0xf]
    %v33 = vld [vmem:[%s0 + $0x50] sm:$0xf]
    %v34 = vld [vmem:[%s0 + $0x54] sm:$0xf]
    %v35 = vld [vmem:[%s0 + $0x58] sm:$0xf]
    %v36 = vld [vmem:[%s0 + $0x5c] sm:$0xf]
    %v37 = vld [vmem:[%s0 + $0x60] sm:$0xf]
    %v38 = vld [vmem:[%s0 + $0x64] sm:$0xf]
    %v39 = vld [vmem:[%s0 + $0x68] sm:$0xf]
    %v40 = vld [vmem:[%s0 + $0x6c] sm:$0xf]
    %v41 = vld [vmem:[%s0 + $0x70] sm:$0xf]
    %v42 = vld [vmem:[%s0 + $0x74] sm:$0xf]
    %v43 = vld [vmem:[%s0 + $0x78] sm:$0xf]
    %v44 = vld [vmem:[%s0 + $0x7c] sm:$0xf]
    %v45 = vld [vmem:[%s0 + $0x80] sm:$0xf]
    %v46 = vld [vmem:[%s0 + $0x84] sm:$0xf]
    %v47 = vld [vmem:[%s0 + $0x88] sm:$0xf]
    %v48 = vld [vmem:[%s0 + $0x8c] sm:$0xf]
    %v49 = vld [vmem:[%s0 + $0x90] sm:$0xf]
    %v50 = vld [vmem:[%s0 + $0x94] sm:$0xf]
    %v51 = vld [vmem:[%s0 + $0x98] sm:$0xf]
    %v52 = vld [vmem:[%s0 + $0x9c] sm:$0xf]
    %v53 = vld [vmem:[%s0 + $0xa0] sm:$0xf]
    %v54 = vld [vmem:[%s0 + $0xa4] sm:$0xf]
    %v55 = vld [vmem:[%s0 + $0xa8] sm:$0xf]
    %v56 = vld [vmem:[%s0 + $0xac] sm:$0xf]
    %v57 = vld [vmem:[%s0 + $0xb0] sm:$0xf]
    %v58 = vld [vmem:[%s0 + $0xb4] sm:$0xf]
    %v59 = vld [vmem:[%s0 + $0xb8] sm:$0xf]
    %v60 = vld [vmem:[%s0 + $0xbc] sm:$0xf]
    %v61 = vld [vmem:[%s0 + $0xc0] sm:$0xf]
    %v62 = vld [vmem:[%s0 + $0xc4] sm:$0xf]
    %v63 = vld [vmem:[%s0 + $0xc8] sm:$0xf]
    %v64 = vld [vmem:[%s0 + $0xcc] sm:$0xf]
    %v65 = vld [vmem:[%s0 + $0xd0] sm:$0xf]
    %v66 = vld [vmem:[%s0 + $0xd4] sm:$0xf]
    %v67 = vld [vmem:[%s0 + $0xd8] sm:$0xf]
    %v68 = vld [vmem:[%s0 + $0xdc] sm:$0xf]
    %v69 = vld [vmem:[%s0 + $0xe0] sm:$0xf]
    %v70 = vld [vmem:[%s0 + $0xe4] sm:$0xf]
    %v71 = vld [vmem:[%s0 + $0xe8] sm:$0xf]
    %v72 = vld [vmem:[%s0 + $0xec] sm:$0xf]
    %v73 = vld [vmem:[%s0 + $0xf0] sm:$0xf]
    %v74 = vld [vmem:[%s0 + $0xf4] sm:$0xf]
    %v75 = vld [vmem:[%s0 + $0xf8] sm:$0xf]
    %v76 = vld [vmem:[%s0 + $0xfc] sm:$0xf]
    %v77 = vld [vmem:[%s1] sm:$0xf]
    %v78 = vld [vmem:[%s1 + $0x4] sm:$0xf]
    %v79 = vld [vmem:[%s1 + $0x8] sm:$0xf]
    %v80 = vld [vmem:[%s1 + $0xc] sm:$0xf]
    %v81 = vld [vmem:[%s1 + $0x10] sm:$0xf]
    %v82 = vld [vmem:[%s1 + $0x14] sm:$0xf]
    %v83 = vld [vmem:[%s1 + $0x18] sm:$0xf]
    %v84 = vld [vmem:[%s1 + $0x1c] sm:$0xf]
    %v85 = vld [vmem:[%s1 + $0x20] sm:$0xf]
    %v86 = vld [vmem:[%s1 + $0x24] sm:$0xf]
    %v87 = vld [vmem:[%s1 + $0x28] sm:$0xf]
    %v88 = vld [vmem:[%s1 + $0x2c] sm:$0xf]
    %v89 = vld [vmem:[%s1 + $0x30] sm:$0xf]
    %v90 = vld [vmem:[%s1 + $0x34] sm:$0xf]
    %v91 = vld [vmem:[%s1 + $0x38] sm:$0xf]
    %v92 = vld [vmem:[%s1 + $0x3c] sm:$0xf]
    %v157 = vunpack.c.l.b16 %v13
    %v158 = vunpack.c.l.b16 %v14
    %v159 = vunpack.c.l.b16 %v15
    %v160 = vunpack.c.l.b16 %v16
    %v161 = vunpack.c.l.b16 %v17
    %v162 = vunpack.c.l.b16 %v18
    %v163 = vunpack.c.l.b16 %v19
    %v164 = vunpack.c.l.b16 %v20
    %v165 = vunpack.c.l.b16 %v21
    %v166 = vunpack.c.l.b16 %v22
    %v167 = vunpack.c.l.b16 %v23
    %v168 = vunpack.c.l.b16 %v24
    %v169 = vunpack.c.l.b16 %v25
    %v170 = vunpack.c.l.b16 %v26
    %v171 = vunpack.c.l.b16 %v27
    %v172 = vunpack.c.l.b16 %v28
    %v173 = vunpack.c.l.b16 %v29
    %v174 = vunpack.c.l.b16 %v30
    %v175 = vunpack.c.l.b16 %v31
    %v176 = vunpack.c.l.b16 %v32
    %v177 = vunpack.c.l.b16 %v33
    %v178 = vunpack.c.l.b16 %v34
    %v179 = vunpack.c.l.b16 %v35
    %v180 = vunpack.c.l.b16 %v36
    %v181 = vunpack.c.l.b16 %v37
    %v182 = vunpack.c.l.b16 %v38
    %v183 = vunpack.c.l.b16 %v39
    %v184 = vunpack.c.l.b16 %v40
    %v185 = vunpack.c.l.b16 %v41
    %v186 = vunpack.c.l.b16 %v42
    %v187 = vunpack.c.l.b16 %v43
    %v188 = vunpack.c.l.b16 %v44
    %v189 = vunpack.c.l.b16 %v45
    %v190 = vunpack.c.l.b16 %v46
    %v191 = vunpack.c.l.b16 %v47
    %v192 = vunpack.c.l.b16 %v48
    %v193 = vunpack.c.l.b16 %v49
    %v194 = vunpack.c.l.b16 %v50
    %v195 = vunpack.c.l.b16 %v51
    %v196 = vunpack.c.l.b16 %v52
    %v197 = vunpack.c.l.b16 %v53
    %v198 = vunpack.c.l.b16 %v54
    %v199 = vunpack.c.l.b16 %v55
    %v200 = vunpack.c.l.b16 %v56
    %v201 = vunpack.c.l.b16 %v57
    %v202 = vunpack.c.l.b16 %v58
    %v203 = vunpack.c.l.b16 %v59
    %v204 = vunpack.c.l.b16 %v60
    %v205 = vunpack.c.l.b16 %v61
    %v206 = vunpack.c.l.b16 %v62
    %v207 = vunpack.c.l.b16 %v63
    %v208 = vunpack.c.l.b16 %v64
    %v209 = vunpack.c.l.b16 %v65
    %v210 = vunpack.c.l.b16 %v66
    %v211 = vunpack.c.l.b16 %v67
    %v212 = vunpack.c.l.b16 %v68
    %v213 = vunpack.c.l.b16 %v69
    %v214 = vunpack.c.l.b16 %v70
    %v215 = vunpack.c.l.b16 %v71
    %v216 = vunpack.c.l.b16 %v72
    %v217 = vunpack.c.l.b16 %v73
    %v218 = vunpack.c.l.b16 %v74
    %v219 = vunpack.c.l.b16 %v75
    %v220 = vunpack.c.l.b16 %v76
    %v221 = vpack.c.b16 %v158, %v157
    %v222 = vpack.c.b16 %v160, %v159
    %v223 = vpack.c.b16 %v162, %v161
    %v224 = vpack.c.b16 %v164, %v163
    %v225 = vpack.c.b16 %v166, %v165
    %v226 = vpack.c.b16 %v168, %v167
    %v227 = vpack.c.b16 %v170, %v169
    %v228 = vpack.c.b16 %v172, %v171
    %v229 = vpack.c.b16 %v174, %v173
    %v230 = vpack.c.b16 %v176, %v175
    %v231 = vpack.c.b16 %v178, %v177
    %v232 = vpack.c.b16 %v180, %v179
    %v233 = vpack.c.b16 %v182, %v181
    %v234 = vpack.c.b16 %v184, %v183
    %v235 = vpack.c.b16 %v186, %v185
    %v236 = vpack.c.b16 %v188, %v187
    %v237 = vpack.c.b16 %v190, %v189
    %v238 = vpack.c.b16 %v192, %v191
    %v239 = vpack.c.b16 %v194, %v193
    %v240 = vpack.c.b16 %v196, %v195
    %v241 = vpack.c.b16 %v198, %v197
    %v242 = vpack.c.b16 %v200, %v199
    %v243 = vpack.c.b16 %v202, %v201
    %v244 = vpack.c.b16 %v204, %v203
    %v245 = vpack.c.b16 %v206, %v205
    %v246 = vpack.c.b16 %v208, %v207
    %v247 = vpack.c.b16 %v210, %v209
    %v248 = vpack.c.b16 %v212, %v211
    %v249 = vpack.c.b16 %v214, %v213
    %v250 = vpack.c.b16 %v216, %v215
    %v251 = vpack.c.b16 %v218, %v217
    %v252 = vpack.c.b16 %v220, %v219
    %v301 = vunpack.c.l.b16 %v77
    %v302 = vunpack.c.l.b16 %v78
    %v303 = vunpack.c.l.b16 %v79
    %v304 = vunpack.c.l.b16 %v80
    %v305 = vunpack.c.l.b16 %v81
    %v306 = vunpack.c.l.b16 %v82
    %v307 = vunpack.c.l.b16 %v83
    %v308 = vunpack.c.l.b16 %v84
    %v309 = vunpack.c.l.b16 %v85
    %v310 = vunpack.c.l.b16 %v86
    %v311 = vunpack.c.l.b16 %v87
    %v312 = vunpack.c.l.b16 %v88
    %v313 = vunpack.c.l.b16 %v89
    %v314 = vunpack.c.l.b16 %v90
    %v315 = vunpack.c.l.b16 %v91
    %v316 = vunpack.c.l.b16 %v92
    %v317 = vpack.c.b16 %v302, %v301
    %v318 = vpack.c.b16 %v304, %v303
    %v319 = vpack.c.b16 %v306, %v305
    %v320 = vpack.c.b16 %v308, %v307
    %v321 = vpack.c.b16 %v310, %v309
    %v322 = vpack.c.b16 %v312, %v311
    %v323 = vpack.c.b16 %v314, %v313
    %v324 = vpack.c.b16 %v316, %v315
    %333 = vmatprep.subr.bf16.mxu0 0
    %334 = vmatpush1.bf16.msra.mxu0 %v324
    %335 = vmatprep.subr.bf16.mxu0 0
    %336 = vmatpush1.bf16.msra.mxu0 %v323
    %337 = vmatprep.subr.bf16.mxu0 0
    %338 = vmatpush1.bf16.msra.mxu0 %v322
    %339 = vmatprep.subr.bf16.mxu0 0
    %340 = vmatpush1.bf16.msra.mxu0 %v321
    %341 = vmatprep.subr.bf16.mxu0 0
    %342 = vmatpush1.bf16.msra.mxu0 %v320
    %343 = vmatprep.subr.bf16.mxu0 0
    %344 = vmatpush1.bf16.msra.mxu0 %v319
    %345 = vmatprep.subr.bf16.mxu0 0
    %346 = vmatpush1.bf16.msra.mxu0 %v318
    %347 = vmatprep.subr.bf16.mxu0 0
    %348 = vmatpush1.bf16.msra.mxu0 %v317
    %349 = vmatprep.subr.bf16.mxu0 0
    %350 = vmatpush2.bf16.msra.mxu0 0
    %351 = vmatprep.subr.bf16.mxu0 0
    %352 = vmatpush2.bf16.msra.mxu0 0
    %353 = vmatprep.subr.bf16.mxu0 0
    %354 = vmatpush2.bf16.msra.mxu0 0
    %355 = vmatprep.subr.bf16.mxu0 0
    %356 = vmatpush2.bf16.msra.mxu0 0
    %357 = vmatprep.subr.bf16.mxu0 0
    %358 = vmatpush2.bf16.msra.mxu0 0
    %359 = vmatprep.subr.bf16.mxu0 0
    %360 = vmatpush2.bf16.msra.mxu0 0
    %361 = vmatprep.subr.bf16.mxu0 0
    %362 = vmatpush2.bf16.msra.mxu0 0
    %363 = vmatprep.subr.bf16.mxu0 0
    %364 = vmatpush2.bf16.msra.mxu0 0
    %365 = vmatprep.mubr.bf16.mxu0 0
    %366 = vmatmul.mubr.bf16.gmra.mxu0 %v221
    %v367 = vpop.f32.mrf.mxu0
    %v368 = vadd.f32 0.0, %v367
    %v369 = vpop.f32.mrf.mxu0
    %v370 = vpop.f32.mrf.mxu0
    %v371 = vadd.f32 0.0, %v370
    %v372 = vpop.f32.mrf.mxu0
    %373 = vmatprep.mubr.bf16.mxu0 0
    %374 = vmatmul.mubr.bf16.gmra.mxu0 %v222
    %v375 = vpop.f32.mrf.mxu0
    %v376 = vadd.f32 0.0, %v375
    %v377 = vpop.f32.mrf.mxu0
    %v378 = vpop.f32.mrf.mxu0
    %v379 = vadd.f32 0.0, %v378
    %v380 = vpop.f32.mrf.mxu0
    %381 = vmatprep.mubr.bf16.mxu0 0
    %382 = vmatmul.mubr.bf16.gmra.mxu0 %v223
    %v383 = vpop.f32.mrf.mxu0
    %v384 = vadd.f32 0.0, %v383
    %v385 = vpop.f32.mrf.mxu0
    %v386 = vpop.f32.mrf.mxu0
    %v387 = vadd.f32 0.0, %v386
    %v388 = vpop.f32.mrf.mxu0
    %389 = vmatprep.mubr.bf16.mxu0 0
    %390 = vmatmul.mubr.bf16.gmra.mxu0 %v224
    %v391 = vpop.f32.mrf.mxu0
    %v392 = vadd.f32 0.0, %v391
    %v393 = vpop.f32.mrf.mxu0
    %v394 = vpop.f32.mrf.mxu0
    %v395 = vadd.f32 0.0, %v394
    %v396 = vpop.f32.mrf.mxu0
    %397 = vmatprep.mubr.bf16.mxu0 0
    %398 = vmatmul.mubr.bf16.gmra.mxu0 %v225
    %v399 = vpop.f32.mrf.mxu0
    %v400 = vadd.f32 0.0, %v399
    %v401 = vpop.f32.mrf.mxu0
    %v402 = vpop.f32.mrf.mxu0
    %v403 = vadd.f32 0.0, %v402
    %v404 = vpop.f32.mrf.mxu0
    %405 = vmatprep.mubr.bf16.mxu0 0
    %406 = vmatmul.mubr.bf16.gmra.mxu0 %v226
    %v407 = vpop.f32.mrf.mxu0
    %v408 = vadd.f32 0.0, %v407
    %v409 = vpop.f32.mrf.mxu0
    %v410 = vpop.f32.mrf.mxu0
    %v411 = vadd.f32 0.0, %v410
    %v412 = vpop.f32.mrf.mxu0
    %413 = vmatprep.mubr.bf16.mxu0 0
    %414 = vmatmul.mubr.bf16.gmra.mxu0 %v227
    %v415 = vpop.f32.mrf.mxu0
    %v416 = vadd.f32 0.0, %v415
    %v417 = vpop.f32.mrf.mxu0
    %v418 = vpop.f32.mrf.mxu0
    %v419 = vadd.f32 0.0, %v418
    %v420 = vpop.f32.mrf.mxu0
    %421 = vmatprep.mubr.bf16.mxu0 0
    %422 = vmatmul.mubr.bf16.gmra.mxu0 %v228
    %v423 = vpop.f32.mrf.mxu0
    %v424 = vadd.f32 0.0, %v423
    %v425 = vpop.f32.mrf.mxu0
    %v426 = vpop.f32.mrf.mxu0
    %v427 = vadd.f32 0.0, %v426
    %v428 = vpop.f32.mrf.mxu0
    %429 = vmatprep.mubr.bf16.mxu0 0
    %430 = vmatmul.mubr.bf16.gmra.mxu0 %v229
    %v431 = vpop.f32.mrf.mxu0
    %v432 = vadd.f32 0.0, %v431
    %v433 = vpop.f32.mrf.mxu0
    %v434 = vpop.f32.mrf.mxu0
    %v435 = vadd.f32 0.0, %v434
    %v436 = vpop.f32.mrf.mxu0
    %437 = vmatprep.mubr.bf16.mxu0 0
    %438 = vmatmul.mubr.bf16.gmra.mxu0 %v230
    %v439 = vpop.f32.mrf.mxu0
    %v440 = vadd.f32 0.0, %v439
    %v441 = vpop.f32.mrf.mxu0
    %v442 = vpop.f32.mrf.mxu0
    %v443 = vadd.f32 0.0, %v442
    %v444 = vpop.f32.mrf.mxu0
    %445 = vmatprep.mubr.bf16.mxu0 0
    %446 = vmatmul.mubr.bf16.gmra.mxu0 %v231
    %v447 = vpop.f32.mrf.mxu0
    %v448 = vadd.f32 0.0, %v447
    %v449 = vpop.f32.mrf.mxu0
    %v450 = vpop.f32.mrf.mxu0
    %v451 = vadd.f32 0.0, %v450
    %v452 = vpop.f32.mrf.mxu0
    %453 = vmatprep.mubr.bf16.mxu0 0
    %454 = vmatmul.mubr.bf16.gmra.mxu0 %v232
    %v455 = vpop.f32.mrf.mxu0
    %v456 = vadd.f32 0.0, %v455
    %v457 = vpop.f32.mrf.mxu0
    %v458 = vpop.f32.mrf.mxu0
    %v459 = vadd.f32 0.0, %v458
    %v460 = vpop.f32.mrf.mxu0
    %461 = vmatprep.mubr.bf16.mxu0 0
    %462 = vmatmul.mubr.bf16.gmra.mxu0 %v233
    %v463 = vpop.f32.mrf.mxu0
    %v464 = vadd.f32 0.0, %v463
    %v465 = vpop.f32.mrf.mxu0
    %v466 = vpop.f32.mrf.mxu0
    %v467 = vadd.f32 0.0, %v466
    %v468 = vpop.f32.mrf.mxu0
    %469 = vmatprep.mubr.bf16.mxu0 0
    %470 = vmatmul.mubr.bf16.gmra.mxu0 %v234
    %v471 = vpop.f32.mrf.mxu0
    %v472 = vadd.f32 0.0, %v471
    %v473 = vpop.f32.mrf.mxu0
    %v474 = vpop.f32.mrf.mxu0
    %v475 = vadd.f32 0.0, %v474
    %v476 = vpop.f32.mrf.mxu0
    %477 = vmatprep.mubr.bf16.mxu0 0
    %478 = vmatmul.mubr.bf16.gmra.mxu0 %v235
    %v479 = vpop.f32.mrf.mxu0
    %v480 = vadd.f32 0.0, %v479
    %v481 = vpop.f32.mrf.mxu0
    %v482 = vpop.f32.mrf.mxu0
    %v483 = vadd.f32 0.0, %v482
    %v484 = vpop.f32.mrf.mxu0
    %485 = vmatprep.mubr.bf16.mxu0 0
    %486 = vmatmul.mubr.bf16.gmra.mxu0 %v236
    %v487 = vpop.f32.mrf.mxu0
    %v488 = vadd.f32 0.0, %v487
    %v489 = vpop.f32.mrf.mxu0
    %v490 = vpop.f32.mrf.mxu0
    %v491 = vadd.f32 0.0, %v490
    %v492 = vpop.f32.mrf.mxu0
    %493 = vmatprep.mubr.bf16.mxu0 0
    %494 = vmatmul.mubr.bf16.gmra.mxu0 %v237
    %v495 = vpop.f32.mrf.mxu0
    %v496 = vadd.f32 0.0, %v495
    %v497 = vpop.f32.mrf.mxu0
    %v498 = vpop.f32.mrf.mxu0
    %v499 = vadd.f32 0.0, %v498
    %v500 = vpop.f32.mrf.mxu0
    %501 = vmatprep.mubr.bf16.mxu0 0
    %502 = vmatmul.mubr.bf16.gmra.mxu0 %v238
    %v503 = vpop.f32.mrf.mxu0
    %v504 = vadd.f32 0.0, %v503
    %v505 = vpop.f32.mrf.mxu0
    %v506 = vpop.f32.mrf.mxu0
    %v507 = vadd.f32 0.0, %v506
    %v508 = vpop.f32.mrf.mxu0
    %509 = vmatprep.mubr.bf16.mxu0 0
    %510 = vmatmul.mubr.bf16.gmra.mxu0 %v239
    %v511 = vpop.f32.mrf.mxu0
    %v512 = vadd.f32 0.0, %v511
    %v513 = vpop.f32.mrf.mxu0
    %v514 = vpop.f32.mrf.mxu0
    %v515 = vadd.f32 0.0, %v514
    %v516 = vpop.f32.mrf.mxu0
    %517 = vmatprep.mubr.bf16.mxu0 0
    %518 = vmatmul.mubr.bf16.gmra.mxu0 %v240
    %v519 = vpop.f32.mrf.mxu0
    %v520 = vadd.f32 0.0, %v519
    %v521 = vpop.f32.mrf.mxu0
    %v522 = vpop.f32.mrf.mxu0
    %v523 = vadd.f32 0.0, %v522
    %v524 = vpop.f32.mrf.mxu0
    %525 = vmatprep.mubr.bf16.mxu0 0
    %526 = vmatmul.mubr.bf16.gmra.mxu0 %v241
    %v527 = vpop.f32.mrf.mxu0
    %v528 = vadd.f32 0.0, %v527
    %v529 = vpop.f32.mrf.mxu0
    %v530 = vpop.f32.mrf.mxu0
    %v531 = vadd.f32 0.0, %v530
    %v532 = vpop.f32.mrf.mxu0
    %533 = vmatprep.mubr.bf16.mxu0 0
    %534 = vmatmul.mubr.bf16.gmra.mxu0 %v242
    %v535 = vpop.f32.mrf.mxu0
    %v536 = vadd.f32 0.0, %v535
    %v537 = vpop.f32.mrf.mxu0
    %v538 = vpop.f32.mrf.mxu0
    %v539 = vadd.f32 0.0, %v538
    %v540 = vpop.f32.mrf.mxu0
    %541 = vmatprep.mubr.bf16.mxu0 0
    %542 = vmatmul.mubr.bf16.gmra.mxu0 %v243
    %v543 = vpop.f32.mrf.mxu0
    %v544 = vadd.f32 0.0, %v543
    %v545 = vpop.f32.mrf.mxu0
    %v546 = vpop.f32.mrf.mxu0
    %v547 = vadd.f32 0.0, %v546
    %v548 = vpop.f32.mrf.mxu0
    %549 = vmatprep.mubr.bf16.mxu0 0
    %550 = vmatmul.mubr.bf16.gmra.mxu0 %v244
    %v551 = vpop.f32.mrf.mxu0
    %v552 = vadd.f32 0.0, %v551
    %v553 = vpop.f32.mrf.mxu0
    %v554 = vpop.f32.mrf.mxu0
    %v555 = vadd.f32 0.0, %v554
    %v556 = vpop.f32.mrf.mxu0
    %557 = vmatprep.mubr.bf16.mxu0 0
    %558 = vmatmul.mubr.bf16.gmra.mxu0 %v245
    %v559 = vpop.f32.mrf.mxu0
    %v560 = vadd.f32 0.0, %v559
    %v561 = vpop.f32.mrf.mxu0
    %v562 = vpop.f32.mrf.mxu0
    %v563 = vadd.f32 0.0, %v562
    %v564 = vpop.f32.mrf.mxu0
    %565 = vmatprep.mubr.bf16.mxu0 0
    %566 = vmatmul.mubr.bf16.gmra.mxu0 %v246
    %v567 = vpop.f32.mrf.mxu0
    %v568 = vadd.f32 0.0, %v567
    %v569 = vpop.f32.mrf.mxu0
    %v570 = vpop.f32.mrf.mxu0
    %v571 = vadd.f32 0.0, %v570
    %v572 = vpop.f32.mrf.mxu0
    %573 = vmatprep.mubr.bf16.mxu0 0
    %574 = vmatmul.mubr.bf16.gmra.mxu0 %v247
    %v575 = vpop.f32.mrf.mxu0
    %v576 = vadd.f32 0.0, %v575
    %v577 = vpop.f32.mrf.mxu0
    %v578 = vpop.f32.mrf.mxu0
    %v579 = vadd.f32 0.0, %v578
    %v580 = vpop.f32.mrf.mxu0
    %581 = vmatprep.mubr.bf16.mxu0 0
    %582 = vmatmul.mubr.bf16.gmra.mxu0 %v248
    %v583 = vpop.f32.mrf.mxu0
    %v584 = vadd.f32 0.0, %v583
    %v585 = vpop.f32.mrf.mxu0
    %v586 = vpop.f32.mrf.mxu0
    %v587 = vadd.f32 0.0, %v586
    %v588 = vpop.f32.mrf.mxu0
    %589 = vmatprep.mubr.bf16.mxu0 0
    %590 = vmatmul.mubr.bf16.gmra.mxu0 %v249
    %v591 = vpop.f32.mrf.mxu0
    %v592 = vadd.f32 0.0, %v591
    %v593 = vpop.f32.mrf.mxu0
    %v594 = vpop.f32.mrf.mxu0
    %v595 = vadd.f32 0.0, %v594
    %v596 = vpop.f32.mrf.mxu0
    %597 = vmatprep.mubr.bf16.mxu0 0
    %598 = vmatmul.mubr.bf16.gmra.mxu0 %v250
    %v599 = vpop.f32.mrf.mxu0
    %v600 = vadd.f32 0.0, %v599
    %v601 = vpop.f32.mrf.mxu0
    %v602 = vpop.f32.mrf.mxu0
    %v603 = vadd.f32 0.0, %v602
    %v604 = vpop.f32.mrf.mxu0
    %605 = vmatprep.mubr.bf16.mxu0 0
    %606 = vmatmul.mubr.bf16.gmra.mxu0 %v251
    %v607 = vpop.f32.mrf.mxu0
    %v608 = vadd.f32 0.0, %v607
    %v609 = vpop.f32.mrf.mxu0
    %v610 = vpop.f32.mrf.mxu0
    %v611 = vadd.f32 0.0, %v610
    %v612 = vpop.f32.mrf.mxu0
    %613 = vmatprep.mubr.bf16.mxu0 0
    %614 = vmatmul.mubr.bf16.gmra.mxu0 %v252
    %v615 = vpop.f32.mrf.mxu0
    %v616 = vadd.f32 0.0, %v615
    %v617 = vpop.f32.mrf.mxu0
    %v618 = vpop.f32.mrf.mxu0
    %v619 = vadd.f32 0.0, %v618
    %v620 = vpop.f32.mrf.mxu0
    %621 = vdwg.mxu0
    %v622 = vadd.f32 %v368, %v371
    %v623 = vadd.f32 %v622, %v376
    %v624 = vadd.f32 %v623, %v379
    %v625 = vadd.f32 %v624, %v384
    %v626 = vadd.f32 %v625, %v387
    %v627 = vadd.f32 %v626, %v392
    %v628 = vadd.f32 %v627, %v395
    %v629 = vadd.f32 %v628, %v400
    %v630 = vadd.f32 %v629, %v403
    %v631 = vadd.f32 %v630, %v408
    %v632 = vadd.f32 %v631, %v411
    %v633 = vadd.f32 %v632, %v416
    %v634 = vadd.f32 %v633, %v419
    %v635 = vadd.f32 %v634, %v424
    %v636 = vadd.f32 %v635, %v427
    %v637 = vadd.f32 %v636, %v432
    %v638 = vadd.f32 %v637, %v435
    %v639 = vadd.f32 %v638, %v440
    %v640 = vadd.f32 %v639, %v443
    %v641 = vadd.f32 %v640, %v448
    %v642 = vadd.f32 %v641, %v451
    %v643 = vadd.f32 %v642, %v456
    %v644 = vadd.f32 %v643, %v459
    %v645 = vadd.f32 %v644, %v464
    %v646 = vadd.f32 %v645, %v467
    %v647 = vadd.f32 %v646, %v472
    %v648 = vadd.f32 %v647, %v475
    %v649 = vadd.f32 %v648, %v480
    %v650 = vadd.f32 %v649, %v483
    %v651 = vadd.f32 %v650, %v488
    %v652 = vadd.f32 %v651, %v491
    %v653 = vadd.f32 %v652, %v496
    %v654 = vadd.f32 %v653, %v499
    %v655 = vadd.f32 %v654, %v504
    %v656 = vadd.f32 %v655, %v507
    %v657 = vadd.f32 %v656, %v512
    %v658 = vadd.f32 %v657, %v515
    %v659 = vadd.f32 %v658, %v520
    %v660 = vadd.f32 %v659, %v523
    %v661 = vadd.f32 %v660, %v528
    %v662 = vadd.f32 %v661, %v531
    %v663 = vadd.f32 %v662, %v536
    %v664 = vadd.f32 %v663, %v539
    %v665 = vadd.f32 %v664, %v544
    %v666 = vadd.f32 %v665, %v547
    %v667 = vadd.f32 %v666, %v552
    %v668 = vadd.f32 %v667, %v555
    %v669 = vadd.f32 %v668, %v560
    %v670 = vadd.f32 %v669, %v563
    %v671 = vadd.f32 %v670, %v568
    %v672 = vadd.f32 %v671, %v571
    %v673 = vadd.f32 %v672, %v576
    %v674 = vadd.f32 %v673, %v579
    %v675 = vadd.f32 %v674, %v584
    %v676 = vadd.f32 %v675, %v587
    %v677 = vadd.f32 %v676, %v592
    %v678 = vadd.f32 %v677, %v595
    %v679 = vadd.f32 %v678, %v600
    %v680 = vadd.f32 %v679, %v603
    %v681 = vadd.f32 %v680, %v608
    %v682 = vadd.f32 %v681, %v611
    %v683 = vadd.f32 %v682, %v616
    %v684 = vadd.f32 %v683, %v619
    %v685 = vrot.slane %v684, 4
    %v686 = vadd.f32 %v684, %v685
    %v687 = vrot.slane %v686, 2
    %v688 = vadd.f32 %v686, %v687
    %v689 = vrot.slane %v688, 1
    %v690 = vadd.f32 %v688, %v689
    %v691 = vrcp.pop 512.0
    %v692 = vmul.f32 %v690, %v691
    %v693 = vsub.f32 %v368, %v692
    %v694 = vsub.f32 %v371, %v692
    %v695 = vsub.f32 %v376, %v692
    %v696 = vsub.f32 %v379, %v692
    %v697 = vsub.f32 %v384, %v692
    %v698 = vsub.f32 %v387, %v692
    %v699 = vsub.f32 %v392, %v692
    %v700 = vsub.f32 %v395, %v692
    %v701 = vsub.f32 %v400, %v692
    %v702 = vsub.f32 %v403, %v692
    %v703 = vsub.f32 %v408, %v692
    %v704 = vsub.f32 %v411, %v692
    %v705 = vsub.f32 %v416, %v692
    %v706 = vsub.f32 %v419, %v692
    %v707 = vsub.f32 %v424, %v692
    %v708 = vsub.f32 %v427, %v692
    %v709 = vsub.f32 %v432, %v692
    %v710 = vsub.f32 %v435, %v692
    %v711 = vsub.f32 %v440, %v692
    %v712 = vsub.f32 %v443, %v692
    %v713 = vsub.f32 %v448, %v692
    %v714 = vsub.f32 %v451, %v692
    %v715 = vsub.f32 %v456, %v692
    %v716 = vsub.f32 %v459, %v692
    %v717 = vsub.f32 %v464, %v692
    %v718 = vsub.f32 %v467, %v692
    %v719 = vsub.f32 %v472, %v692
    %v720 = vsub.f32 %v475, %v692
    %v721 = vsub.f32 %v480, %v692
    %v722 = vsub.f32 %v483, %v692
    %v723 = vsub.f32 %v488, %v692
    %v724 = vsub.f32 %v491, %v692
    %v725 = vsub.f32 %v496, %v692
    %v726 = vsub.f32 %v499, %v692
    %v727 = vsub.f32 %v504, %v692
    %v728 = vsub.f32 %v507, %v692
    %v729 = vsub.f32 %v512, %v692
    %v730 = vsub.f32 %v515, %v692
    %v731 = vsub.f32 %v520, %v692
    %v732 = vsub.f32 %v523, %v692
    %v733 = vsub.f32 %v528, %v692
    %v734 = vsub.f32 %v531, %v692
    %v735 = vsub.f32 %v536, %v692
    %v736 = vsub.f32 %v539, %v692
    %v737 = vsub.f32 %v544, %v692
    %v738 = vsub.f32 %v547, %v692
    %v739 = vsub.f32 %v552, %v692
    %v740 = vsub.f32 %v555, %v692
    %v741 = vsub.f32 %v560, %v692
    %v742 = vsub.f32 %v563, %v692
    %v743 = vsub.f32 %v568, %v692
    %v744 = vsub.f32 %v571, %v692
    %v745 = vsub.f32 %v576, %v692
    %v746 = vsub.f32 %v579, %v692
    %v747 = vsub.f32 %v584, %v692
    %v748 = vsub.f32 %v587, %v692
    %v749 = vsub.f32 %v592, %v692
    %v750 = vsub.f32 %v595, %v692
    %v751 = vsub.f32 %v600, %v692
    %v752 = vsub.f32 %v603, %v692
    %v753 = vsub.f32 %v608, %v692
    %v754 = vsub.f32 %v611, %v692
    %v755 = vsub.f32 %v616, %v692
    %v756 = vsub.f32 %v619, %v692
    %v757 = vmul.f32 %v693, %v693
    %v758 = vmul.f32 %v694, %v694
    %v759 = vmul.f32 %v695, %v695
    %v760 = vmul.f32 %v696, %v696
    %v761 = vmul.f32 %v697, %v697
    %v762 = vmul.f32 %v698, %v698
    %v763 = vmul.f32 %v699, %v699
    %v764 = vmul.f32 %v700, %v700
    %v765 = vmul.f32 %v701, %v701
    %v766 = vmul.f32 %v702, %v702
    %v767 = vmul.f32 %v703, %v703
    %v768 = vmul.f32 %v704, %v704
    %v769 = vmul.f32 %v705, %v705
    %v770 = vmul.f32 %v706, %v706
    %v771 = vmul.f32 %v707, %v707
    %v772 = vmul.f32 %v708, %v708
    %v773 = vmul.f32 %v709, %v709
    %v774 = vmul.f32 %v710, %v710
    %v775 = vmul.f32 %v711, %v711
    %v776 = vmul.f32 %v712, %v712
    %v777 = vmul.f32 %v713, %v713
    %v778 = vmul.f32 %v714, %v714
    %v779 = vmul.f32 %v715, %v715
    %v780 = vmul.f32 %v716, %v716
    %v781 = vmul.f32 %v717, %v717
    %v782 = vmul.f32 %v718, %v718
    %v783 = vmul.f32 %v719, %v719
    %v784 = vmul.f32 %v720, %v720
    %v785 = vmul.f32 %v721, %v721
    %v786 = vmul.f32 %v722, %v722
    %v787 = vmul.f32 %v723, %v723
    %v788 = vmul.f32 %v724, %v724
    %v789 = vmul.f32 %v725, %v725
    %v790 = vmul.f32 %v726, %v726
    %v791 = vmul.f32 %v727, %v727
    %v792 = vmul.f32 %v728, %v728
    %v793 = vmul.f32 %v729, %v729
    %v794 = vmul.f32 %v730, %v730
    %v795 = vmul.f32 %v731, %v731
    %v796 = vmul.f32 %v732, %v732
    %v797 = vmul.f32 %v733, %v733
    %v798 = vmul.f32 %v734, %v734
    %v799 = vmul.f32 %v735, %v735
    %v800 = vmul.f32 %v736, %v736
    %v801 = vmul.f32 %v737, %v737
    %v802 = vmul.f32 %v738, %v738
    %v803 = vmul.f32 %v739, %v739
    %v804 = vmul.f32 %v740, %v740
    %v805 = vmul.f32 %v741, %v741
    %v806 = vmul.f32 %v742, %v742
    %v807 = vmul.f32 %v743, %v743
    %v808 = vmul.f32 %v744, %v744
    %v809 = vmul.f32 %v745, %v745
    %v810 = vmul.f32 %v746, %v746
    %v811 = vmul.f32 %v747, %v747
    %v812 = vmul.f32 %v748, %v748
    %v813 = vmul.f32 %v749, %v749
    %v814 = vmul.f32 %v750, %v750
    %v815 = vmul.f32 %v751, %v751
    %v816 = vmul.f32 %v752, %v752
    %v817 = vmul.f32 %v753, %v753
    %v818 = vmul.f32 %v754, %v754
    %v819 = vmul.f32 %v755, %v755
    %v820 = vmul.f32 %v756, %v756
    %v821 = vadd.f32 %v757, %v758
    %v822 = vadd.f32 %v821, %v759
    %v823 = vadd.f32 %v822, %v760
    %v824 = vadd.f32 %v823, %v761
    %v825 = vadd.f32 %v824, %v762
    %v826 = vadd.f32 %v825, %v763
    %v827 = vadd.f32 %v826, %v764
    %v828 = vadd.f32 %v827, %v765
    %v829 = vadd.f32 %v828, %v766
    %v830 = vadd.f32 %v829, %v767
    %v831 = vadd.f32 %v830, %v768
    %v832 = vadd.f32 %v831, %v769
    %v833 = vadd.f32 %v832, %v770
    %v834 = vadd.f32 %v833, %v771
    %v835 = vadd.f32 %v834, %v772
    %v836 = vadd.f32 %v835, %v773
    %v837 = vadd.f32 %v836, %v774
    %v838 = vadd.f32 %v837, %v775
    %v839 = vadd.f32 %v838, %v776
    %v840 = vadd.f32 %v839, %v777
    %v841 = vadd.f32 %v840, %v778
    %v842 = vadd.f32 %v841, %v779
    %v843 = vadd.f32 %v842, %v780
    %v844 = vadd.f32 %v843, %v781
    %v845 = vadd.f32 %v844, %v782
    %v846 = vadd.f32 %v845, %v783
    %v847 = vadd.f32 %v846, %v784
    %v848 = vadd.f32 %v847, %v785
    %v849 = vadd.f32 %v848, %v786
    %v850 = vadd.f32 %v849, %v787
    %v851 = vadd.f32 %v850, %v788
    %v852 = vadd.f32 %v851, %v789
    %v853 = vadd.f32 %v852, %v790
    %v854 = vadd.f32 %v853, %v791
    %v855 = vadd.f32 %v854, %v792
    %v856 = vadd.f32 %v855, %v793
    %v857 = vadd.f32 %v856, %v794
    %v858 = vadd.f32 %v857, %v795
    %v859 = vadd.f32 %v858, %v796
    %v860 = vadd.f32 %v859, %v797
    %v861 = vadd.f32 %v860, %v798
    %v862 = vadd.f32 %v861, %v799
    %v863 = vadd.f32 %v862, %v800
    %v864 = vadd.f32 %v863, %v801
    %v865 = vadd.f32 %v864, %v802
    %v866 = vadd.f32 %v865, %v803
    %v867 = vadd.f32 %v866, %v804
    %v868 = vadd.f32 %v867, %v805
    %v869 = vadd.f32 %v868, %v806
    %v870 = vadd.f32 %v869, %v807
    %v871 = vadd.f32 %v870, %v808
    %v872 = vadd.f32 %v871, %v809
    %v873 = vadd.f32 %v872, %v810
    %v874 = vadd.f32 %v873, %v811
    %v875 = vadd.f32 %v874, %v812
    %v876 = vadd.f32 %v875, %v813
    %v877 = vadd.f32 %v876, %v814
    %v878 = vadd.f32 %v877, %v815
    %v879 = vadd.f32 %v878, %v816
    %v880 = vadd.f32 %v879, %v817
    %v881 = vadd.f32 %v880, %v818
    %v882 = vadd.f32 %v881, %v819
    %v883 = vadd.f32 %v882, %v820
    %v884 = vrot.slane %v883, 4
    %v885 = vadd.f32 %v883, %v884
    %v886 = vrot.slane %v885, 2
    %v887 = vadd.f32 %v885, %v886
    %v888 = vrot.slane %v887, 1
    %v889 = vadd.f32 %v887, %v888
    %v890 = vmul.f32 %v889, %v691
    %v891 = vadd.f32 %v890, 1e-05
    %v892 = vrsqrt.pop %v891
    %v893 = vmul.f32 %v693, %v892
    %v894 = vmul.f32 %v694, %v892
    %v895 = vmul.f32 %v695, %v892
    %v896 = vmul.f32 %v696, %v892
    %v897 = vmul.f32 %v697, %v892
    %v898 = vmul.f32 %v698, %v892
    %v899 = vmul.f32 %v699, %v892
    %v900 = vmul.f32 %v700, %v892
    %v901 = vmul.f32 %v701, %v892
    %v902 = vmul.f32 %v702, %v892
    %v903 = vmul.f32 %v703, %v892
    %v904 = vmul.f32 %v704, %v892
    %v905 = vmul.f32 %v705, %v892
    %v906 = vmul.f32 %v706, %v892
    %v907 = vmul.f32 %v707, %v892
    %v908 = vmul.f32 %v708, %v892
    %v909 = vmul.f32 %v709, %v892
    %v910 = vmul.f32 %v710, %v892
    %v911 = vmul.f32 %v711, %v892
    %v912 = vmul.f32 %v712, %v892
    %v913 = vmul.f32 %v713, %v892
    %v914 = vmul.f32 %v714, %v892
    %v915 = vmul.f32 %v715, %v892
    %v916 = vmul.f32 %v716, %v892
    %v917 = vmul.f32 %v717, %v892
    %v918 = vmul.f32 %v718, %v892
    %v919 = vmul.f32 %v719, %v892
    %v920 = vmul.f32 %v720, %v892
    %v921 = vmul.f32 %v721, %v892
    %v922 = vmul.f32 %v722, %v892
    %v923 = vmul.f32 %v723, %v892
    %v924 = vmul.f32 %v724, %v892
    %v925 = vmul.f32 %v725, %v892
    %v926 = vmul.f32 %v726, %v892
    %v927 = vmul.f32 %v727, %v892
    %v928 = vmul.f32 %v728, %v892
    %v929 = vmul.f32 %v729, %v892
    %v930 = vmul.f32 %v730, %v892
    %v931 = vmul.f32 %v731, %v892
    %v932 = vmul.f32 %v732, %v892
    %v933 = vmul.f32 %v733, %v892
    %v934 = vmul.f32 %v734, %v892
    %v935 = vmul.f32 %v735, %v892
    %v936 = vmul.f32 %v736, %v892
    %v937 = vmul.f32 %v737, %v892
    %v938 = vmul.f32 %v738, %v892
    %v939 = vmul.f32 %v739, %v892
    %v940 = vmul.f32 %v740, %v892
    %v941 = vmul.f32 %v741, %v892
    %v942 = vmul.f32 %v742, %v892
    %v943 = vmul.f32 %v743, %v892
    %v944 = vmul.f32 %v744, %v892
    %v945 = vmul.f32 %v745, %v892
    %v946 = vmul.f32 %v746, %v892
    %v947 = vmul.f32 %v747, %v892
    %v948 = vmul.f32 %v748, %v892
    %v949 = vmul.f32 %v749, %v892
    %v950 = vmul.f32 %v750, %v892
    %v951 = vmul.f32 %v751, %v892
    %v952 = vmul.f32 %v752, %v892
    %v953 = vmul.f32 %v753, %v892
    %v954 = vmul.f32 %v754, %v892
    %v955 = vmul.f32 %v755, %v892
    %v956 = vmul.f32 %v756, %v892
    %v957 = vmax.f32 %v893, 0.0
    %v958 = vmax.f32 %v894, 0.0
    %v959 = vmax.f32 %v895, 0.0
    %v960 = vmax.f32 %v896, 0.0
    %v961 = vmax.f32 %v897, 0.0
    %v962 = vmax.f32 %v898, 0.0
    %v963 = vmax.f32 %v899, 0.0
    %v964 = vmax.f32 %v900, 0.0
    %v965 = vmax.f32 %v901, 0.0
    %v966 = vmax.f32 %v902, 0.0
    %v967 = vmax.f32 %v903, 0.0
    %v968 = vmax.f32 %v904, 0.0
    %v969 = vmax.f32 %v905, 0.0
    %v970 = vmax.f32 %v906, 0.0
    %v971 = vmax.f32 %v907, 0.0
    %v972 = vmax.f32 %v908, 0.0
    %v973 = vmax.f32 %v909, 0.0
    %v974 = vmax.f32 %v910, 0.0
    %v975 = vmax.f32 %v911, 0.0
    %v976 = vmax.f32 %v912, 0.0
    %v977 = vmax.f32 %v913, 0.0
    %v978 = vmax.f32 %v914, 0.0
    %v979 = vmax.f32 %v915, 0.0
    %v980 = vmax.f32 %v916, 0.0
    %v981 = vmax.f32 %v917, 0.0
    %v982 = vmax.f32 %v918, 0.0
    %v983 = vmax.f32 %v919, 0.0
    %v984 = vmax.f32 %v920, 0.0
    %v985 = vmax.f32 %v921, 0.0
    %v986 = vmax.f32 %v922, 0.0
    %v987 = vmax.f32 %v923, 0.0
    %v988 = vmax.f32 %v924, 0.0
    %v989 = vmax.f32 %v925, 0.0
    %v990 = vmax.f32 %v926, 0.0
    %v991 = vmax.f32 %v927, 0.0
    %v992 = vmax.f32 %v928, 0.0
    %v993 = vmax.f32 %v929, 0.0
    %v994 = vmax.f32 %v930, 0.0
    %v995 = vmax.f32 %v931, 0.0
    %v996 = vmax.f32 %v932, 0.0
    %v997 = vmax.f32 %v933, 0.0
    %v998 = vmax.f32 %v934, 0.0
    %v999 = vmax.f32 %v935, 0.0
    %v1000 = vmax.f32 %v936, 0.0
    %v1001 = vmax.f32 %v937, 0.0
    %v1002 = vmax.f32 %v938, 0.0
    %v1003 = vmax.f32 %v939, 0.0
    %v1004 = vmax.f32 %v940, 0.0
    %v1005 = vmax.f32 %v941, 0.0
    %v1006 = vmax.f32 %v942, 0.0
    %v1007 = vmax.f32 %v943, 0.0
    %v1008 = vmax.f32 %v944, 0.0
    %v1009 = vmax.f32 %v945, 0.0
    %v1010 = vmax.f32 %v946, 0.0
    %v1011 = vmax.f32 %v947, 0.0
    %v1012 = vmax.f32 %v948, 0.0
    %v1013 = vmax.f32 %v949, 0.0
    %v1014 = vmax.f32 %v950, 0.0
    %v1015 = vmax.f32 %v951, 0.0
    %v1016 = vmax.f32 %v952, 0.0
    %v1017 = vmax.f32 %v953, 0.0
    %v1018 = vmax.f32 %v954, 0.0
    %v1019 = vmax.f32 %v955, 0.0
    %v1020 = vmax.f32 %v956, 0.0
    %v1021 = vpack.c.bf16 %v958, %v957
    %v1022 = vpack.c.bf16 %v960, %v959
    %v1023 = vpack.c.bf16 %v962, %v961
    %v1024 = vpack.c.bf16 %v964, %v963
    %v1025 = vpack.c.bf16 %v966, %v965
    %v1026 = vpack.c.bf16 %v968, %v967
    %v1027 = vpack.c.bf16 %v970, %v969
    %v1028 = vpack.c.bf16 %v972, %v971
    %v1029 = vpack.c.bf16 %v974, %v973
    %v1030 = vpack.c.bf16 %v976, %v975
    %v1031 = vpack.c.bf16 %v978, %v977
    %v1032 = vpack.c.bf16 %v980, %v979
    %v1033 = vpack.c.bf16 %v982, %v981
    %v1034 = vpack.c.bf16 %v984, %v983
    %v1035 = vpack.c.bf16 %v986, %v985
    %v1036 = vpack.c.bf16 %v988, %v987
    %v1037 = vpack.c.bf16 %v990, %v989
    %v1038 = vpack.c.bf16 %v992, %v991
    %v1039 = vpack.c.bf16 %v994, %v993
    %v1040 = vpack.c.bf16 %v996, %v995
    %v1041 = vpack.c.bf16 %v998, %v997
    %v1042 = vpack.c.bf16 %v1000, %v999
    %v1043 = vpack.c.bf16 %v1002, %v1001
    %v1044 = vpack.c.bf16 %v1004, %v1003
    %v1045 = vpack.c.bf16 %v1006, %v1005
    %v1046 = vpack.c.bf16 %v1008, %v1007
    %v1047 = vpack.c.bf16 %v1010, %v1009
    %v1048 = vpack.c.bf16 %v1012, %v1011
    %v1049 = vpack.c.bf16 %v1014, %v1013
    %v1050 = vpack.c.bf16 %v1016, %v1015
    %v1051 = vpack.c.bf16 %v1018, %v1017
    %v1052 = vpack.c.bf16 %v1020, %v1019
    %v1085 = vunpack.c.l.b16 %v1021
    %v1086 = vunpack.c.h.b16 %v1021
    %v1087 = vunpack.c.l.b16 %v1022
    %v1088 = vunpack.c.h.b16 %v1022
    %v1089 = vunpack.c.l.b16 %v1023
    %v1090 = vunpack.c.h.b16 %v1023
    %v1091 = vunpack.c.l.b16 %v1024
    %v1092 = vunpack.c.h.b16 %v1024
    %v1093 = vunpack.c.l.b16 %v1025
    %v1094 = vunpack.c.h.b16 %v1025
    %v1095 = vunpack.c.l.b16 %v1026
    %v1096 = vunpack.c.h.b16 %v1026
    %v1097 = vunpack.c.l.b16 %v1027
    %v1098 = vunpack.c.h.b16 %v1027
    %v1099 = vunpack.c.l.b16 %v1028
    %v1100 = vunpack.c.h.b16 %v1028
    %v1101 = vunpack.c.l.b16 %v1029
    %v1102 = vunpack.c.h.b16 %v1029
    %v1103 = vunpack.c.l.b16 %v1030
    %v1104 = vunpack.c.h.b16 %v1030
    %v1105 = vunpack.c.l.b16 %v1031
    %v1106 = vunpack.c.h.b16 %v1031
    %v1107 = vunpack.c.l.b16 %v1032
    %v1108 = vunpack.c.h.b16 %v1032
    %v1109 = vunpack.c.l.b16 %v1033
    %v1110 = vunpack.c.h.b16 %v1033
    %v1111 = vunpack.c.l.b16 %v1034
    %v1112 = vunpack.c.h.b16 %v1034
    %v1113 = vunpack.c.l.b16 %v1035
    %v1114 = vunpack.c.h.b16 %v1035
    %v1115 = vunpack.c.l.b16 %v1036
    %v1116 = vunpack.c.h.b16 %v1036
    %v1117 = vunpack.c.l.b16 %v1037
    %v1118 = vunpack.c.h.b16 %v1037
    %v1119 = vunpack.c.l.b16 %v1038
    %v1120 = vunpack.c.h.b16 %v1038
    %v1121 = vunpack.c.l.b16 %v1039
    %v1122 = vunpack.c.h.b16 %v1039
    %v1123 = vunpack.c.l.b16 %v1040
    %v1124 = vunpack.c.h.b16 %v1040
    %v1125 = vunpack.c.l.b16 %v1041
    %v1126 = vunpack.c.h.b16 %v1041
    %v1127 = vunpack.c.l.b16 %v1042
    %v1128 = vunpack.c.h.b16 %v1042
    %v1129 = vunpack.c.l.b16 %v1043
    %v1130 = vunpack.c.h.b16 %v1043
    %v1131 = vunpack.c.l.b16 %v1044
    %v1132 = vunpack.c.h.b16 %v1044
    %v1133 = vunpack.c.l.b16 %v1045
    %v1134 = vunpack.c.h.b16 %v1045
    %v1135 = vunpack.c.l.b16 %v1046
    %v1136 = vunpack.c.h.b16 %v1046
    %v1137 = vunpack.c.l.b16 %v1047
    %v1138 = vunpack.c.h.b16 %v1047
    %v1139 = vunpack.c.l.b16 %v1048
    %v1140 = vunpack.c.h.b16 %v1048
    %v1141 = vunpack.c.l.b16 %v1049
    %v1142 = vunpack.c.h.b16 %v1049
    %v1143 = vunpack.c.l.b16 %v1050
    %v1144 = vunpack.c.h.b16 %v1050
    %v1145 = vunpack.c.l.b16 %v1051
    %v1146 = vunpack.c.h.b16 %v1051
    %v1147 = vunpack.c.l.b16 %v1052
    %v1148 = vunpack.c.h.b16 %v1052
    %v1149 = vpack.c.b16 %v1085, %v1085
    %v1150 = vpack.c.b16 %v1086, %v1086
    %v1151 = vpack.c.b16 %v1087, %v1087
    %v1152 = vpack.c.b16 %v1088, %v1088
    %v1153 = vpack.c.b16 %v1089, %v1089
    %v1154 = vpack.c.b16 %v1090, %v1090
    %v1155 = vpack.c.b16 %v1091, %v1091
    %v1156 = vpack.c.b16 %v1092, %v1092
    %v1157 = vpack.c.b16 %v1093, %v1093
    %v1158 = vpack.c.b16 %v1094, %v1094
    %v1159 = vpack.c.b16 %v1095, %v1095
    %v1160 = vpack.c.b16 %v1096, %v1096
    %v1161 = vpack.c.b16 %v1097, %v1097
    %v1162 = vpack.c.b16 %v1098, %v1098
    %v1163 = vpack.c.b16 %v1099, %v1099
    %v1164 = vpack.c.b16 %v1100, %v1100
    %v1165 = vpack.c.b16 %v1101, %v1101
    %v1166 = vpack.c.b16 %v1102, %v1102
    %v1167 = vpack.c.b16 %v1103, %v1103
    %v1168 = vpack.c.b16 %v1104, %v1104
    %v1169 = vpack.c.b16 %v1105, %v1105
    %v1170 = vpack.c.b16 %v1106, %v1106
    %v1171 = vpack.c.b16 %v1107, %v1107
    %v1172 = vpack.c.b16 %v1108, %v1108
    %v1173 = vpack.c.b16 %v1109, %v1109
    %v1174 = vpack.c.b16 %v1110, %v1110
    %v1175 = vpack.c.b16 %v1111, %v1111
    %v1176 = vpack.c.b16 %v1112, %v1112
    %v1177 = vpack.c.b16 %v1113, %v1113
    %v1178 = vpack.c.b16 %v1114, %v1114
    %v1179 = vpack.c.b16 %v1115, %v1115
    %v1180 = vpack.c.b16 %v1116, %v1116
    %v1181 = vpack.c.b16 %v1117, %v1117
    %v1182 = vpack.c.b16 %v1118, %v1118
    %v1183 = vpack.c.b16 %v1119, %v1119
    %v1184 = vpack.c.b16 %v1120, %v1120
    %v1185 = vpack.c.b16 %v1121, %v1121
    %v1186 = vpack.c.b16 %v1122, %v1122
    %v1187 = vpack.c.b16 %v1123, %v1123
    %v1188 = vpack.c.b16 %v1124, %v1124
    %v1189 = vpack.c.b16 %v1125, %v1125
    %v1190 = vpack.c.b16 %v1126, %v1126
    %v1191 = vpack.c.b16 %v1127, %v1127
    %v1192 = vpack.c.b16 %v1128, %v1128
    %v1193 = vpack.c.b16 %v1129, %v1129
    %v1194 = vpack.c.b16 %v1130, %v1130
    %v1195 = vpack.c.b16 %v1131, %v1131
    %v1196 = vpack.c.b16 %v1132, %v1132
    %v1197 = vpack.c.b16 %v1133, %v1133
    %v1198 = vpack.c.b16 %v1134, %v1134
    %v1199 = vpack.c.b16 %v1135, %v1135
    %v1200 = vpack.c.b16 %v1136, %v1136
    %v1201 = vpack.c.b16 %v1137, %v1137
    %v1202 = vpack.c.b16 %v1138, %v1138
    %v1203 = vpack.c.b16 %v1139, %v1139
    %v1204 = vpack.c.b16 %v1140, %v1140
    %v1205 = vpack.c.b16 %v1141, %v1141
    %v1206 = vpack.c.b16 %v1142, %v1142
    %v1207 = vpack.c.b16 %v1143, %v1143
    %v1208 = vpack.c.b16 %v1144, %v1144
    %v1209 = vpack.c.b16 %v1145, %v1145
    %v1210 = vpack.c.b16 %v1146, %v1146
    %v1211 = vpack.c.b16 %v1147, %v1147
    %v1212 = vpack.c.b16 %v1148, %v1148
    %1277 = vst [vmem:[#allocation2] sm:$0xf] %v1149
    %1278 = vst [vmem:[#allocation2 + $0x4] sm:$0xf] %v1150
    %1279 = vst [vmem:[#allocation2 + $0x8] sm:$0xf] %v1151
    %1280 = vst [vmem:[#allocation2 + $0xc] sm:$0xf] %v1152
    %1281 = vst [vmem:[#allocation2 + $0x10] sm:$0xf] %v1153
    %1282 = vst [vmem:[#allocation2 + $0x14] sm:$0xf] %v1154
    %1283 = vst [vmem:[#allocation2 + $0x18] sm:$0xf] %v1155
    %1284 = vst [vmem:[#allocation2 + $0x1c] sm:$0xf] %v1156
    %1285 = vst [vmem:[#allocation2 + $0x20] sm:$0xf] %v1157
    %1286 = vst [vmem:[#allocation2 + $0x24] sm:$0xf] %v1158
    %1287 = vst [vmem:[#allocation2 + $0x28] sm:$0xf] %v1159
    %1288 = vst [vmem:[#allocation2 + $0x2c] sm:$0xf] %v1160
    %1289 = vst [vmem:[#allocation2 + $0x30] sm:$0xf] %v1161
    %1290 = vst [vmem:[#allocation2 + $0x34] sm:$0xf] %v1162
    %1291 = vst [vmem:[#allocation2 + $0x38] sm:$0xf] %v1163
    %1292 = vst [vmem:[#allocation2 + $0x3c] sm:$0xf] %v1164
    %1293 = vst [vmem:[#allocation2 + $0x40] sm:$0xf] %v1165
    %1294 = vst [vmem:[#allocation2 + $0x44] sm:$0xf] %v1166
    %1295 = vst [vmem:[#allocation2 + $0x48] sm:$0xf] %v1167
    %1296 = vst [vmem:[#allocation2 + $0x4c] sm:$0xf] %v1168
    %1297 = vst [vmem:[#allocation2 + $0x50] sm:$0xf] %v1169
    %1298 = vst [vmem:[#allocation2 + $0x54] sm:$0xf] %v1170
    %1299 = vst [vmem:[#allocation2 + $0x58] sm:$0xf] %v1171
    %1300 = vst [vmem:[#allocation2 + $0x5c] sm:$0xf] %v1172
    %1301 = vst [vmem:[#allocation2 + $0x60] sm:$0xf] %v1173
    %1302 = vst [vmem:[#allocation2 + $0x64] sm:$0xf] %v1174
    %1303 = vst [vmem:[#allocation2 + $0x68] sm:$0xf] %v1175
    %1304 = vst [vmem:[#allocation2 + $0x6c] sm:$0xf] %v1176
    %1305 = vst [vmem:[#allocation2 + $0x70] sm:$0xf] %v1177
    %1306 = vst [vmem:[#allocation2 + $0x74] sm:$0xf] %v1178
    %1307 = vst [vmem:[#allocation2 + $0x78] sm:$0xf] %v1179
    %1308 = vst [vmem:[#allocation2 + $0x7c] sm:$0xf] %v1180
    %1309 = vst [vmem:[#allocation2 + $0x80] sm:$0xf] %v1181
    %1310 = vst [vmem:[#allocation2 + $0x84] sm:$0xf] %v1182
    %1311 = vst [vmem:[#allocation2 + $0x88] sm:$0xf] %v1183
    %1312 = vst [vmem:[#allocation2 + $0x8c] sm:$0xf] %v1184
    %1313 = vst [vmem:[#allocation2 + $0x90] sm:$0xf] %v1185
    %1314 = vst [vmem:[#allocation2 + $0x94] sm:$0xf] %v1186
    %1315 = vst [vmem:[#allocation2 + $0x98] sm:$0xf] %v1187
    %1316 = vst [vmem:[#allocation2 + $0x9c] sm:$0xf] %v1188
    %1317 = vst [vmem:[#allocation2 + $0xa0] sm:$0xf] %v1189
    %1318 = vst [vmem:[#allocation2 + $0xa4] sm:$0xf] %v1190
    %1319 = vst [vmem:[#allocation2 + $0xa8] sm:$0xf] %v1191
    %1320 = vst [vmem:[#allocation2 + $0xac] sm:$0xf] %v1192
    %1321 = vst [vmem:[#allocation2 + $0xb0] sm:$0xf] %v1193
    %1322 = vst [vmem:[#allocation2 + $0xb4] sm:$0xf] %v1194
    %1323 = vst [vmem:[#allocation2 + $0xb8] sm:$0xf] %v1195
    %1324 = vst [vmem:[#allocation2 + $0xbc] sm:$0xf] %v1196
    %1325 = vst [vmem:[#allocation2 + $0xc0] sm:$0xf] %v1197
    %1326 = vst [vmem:[#allocation2 + $0xc4] sm:$0xf] %v1198
    %1327 = vst [vmem:[#allocation2 + $0xc8] sm:$0xf] %v1199
    %1328 = vst [vmem:[#allocation2 + $0xcc] sm:$0xf] %v1200
    %1329 = vst [vmem:[#allocation2 + $0xd0] sm:$0xf] %v1201
    %1330 = vst [vmem:[#allocation2 + $0xd4] sm:$0xf] %v1202
    %1331 = vst [vmem:[#allocation2 + $0xd8] sm:$0xf] %v1203
    %1332 = vst [vmem:[#allocation2 + $0xdc] sm:$0xf] %v1204
    %1333 = vst [vmem:[#allocation2 + $0xe0] sm:$0xf] %v1205
    %1334 = vst [vmem:[#allocation2 + $0xe4] sm:$0xf] %v1206
    %1335 = vst [vmem:[#allocation2 + $0xe8] sm:$0xf] %v1207
    %1336 = vst [vmem:[#allocation2 + $0xec] sm:$0xf] %v1208
    %1337 = vst [vmem:[#allocation2 + $0xf0] sm:$0xf] %v1209
    %1338 = vst [vmem:[#allocation2 + $0xf4] sm:$0xf] %v1210
    %1339 = vst [vmem:[#allocation2 + $0xf8] sm:$0xf] %v1211
    %1340 = vst [vmem:[#allocation2 + $0xfc] sm:$0xf] %v1212
    // Predicated region
    $region10: #{conv_bn.1} parent=1 // pred_check
      _
    $region11: #{conv_bn.1} parent=1 // pred_check_branch
      %1342 = sbr.rel (0) target = $region13
    $region12: #{conv_bn.1} parent=1 // pred_region
      %s1344 = ssub.s32 4096, 4096
      %1345 = vsyncadd [#allocation3], %s1344
      %s1346 = sshll.u32 [#allocation2], 4
      %s1347 = int_to_ptr.vmem [resolvable:$true] %s1346
      %1352 = dma.vmem_to_hbm [thread:$0]  %s1347, 4096, %s2, [#allocation3], 64, 64, 4
    $region13: #{conv_bn.1} parent=1 // pred_fallthru
      _
    // Predicated region
    $region14: #{conv_bn.1} parent=1 // pred_check
      _
    $region15: #{conv_bn.1} parent=1 // pred_check_branch
      %1354 = sbr.rel (0) target = $region17
    $region16: #{conv_bn.1} parent=1 // pred_region
      %1355 = dma.done [#allocation3], 4096
    $region17: #{conv_bn.1} parent=1 // pred_fallthru
      _
    %1356 = vsyncpa [#allocation3], 1

</llo_original>
